<compile_context>
chip_gen: v7x
topology: tpu7x:2x2x1
jax: 0.10.0
libtpu: 0.0.40
codegen_flags: <defaults>
</compile_context>

<pallas_src>
import jax
import jax.numpy as jnp
from jax.experimental import pallas as pl
from jax.experimental.pallas import tpu as pltpu

_LANE = 128
_NEG_FILL = -1e30  # logit bias for padded action lanes -> exp underflows to 0.0


def actor_kernel(x_ref, w1_ref, b1_ref, w2_ref, b2_ref, w3_ref, b3_ref, o_ref):
    # One batch tile per grid step; weights/biases are resident across steps.
    x = x_ref[...]  # bf16 [TB, state_dim]

    # Linear(state_dim, 256) + ReLU  (bf16 MXU inputs, f32 accumulate)
    h1 = jnp.dot(x, w1_ref[...], preferred_element_type=jnp.float32) + b1_ref[...]
    h1 = jnp.maximum(h1, 0.0)

    # Linear(256, 128) + ReLU
    h2 = jnp.dot(h1.astype(jnp.bfloat16), w2_ref[...],
                 preferred_element_type=jnp.float32) + b2_ref[...]
    h2 = jnp.maximum(h2, 0.0)

    # Linear(128, action_dim) computed lane-dense (padded to 128 output cols).
    # Padded columns have zero weights and a -1e30 bias -> exact 0 softmax mass.
    logits = jnp.dot(h2.astype(jnp.bfloat16), w3_ref[...],
                     preferred_element_type=jnp.float32) + b3_ref[...]

    # Numerically stable softmax; reciprocal-multiply instead of divide.
    m = jnp.max(logits, axis=-1, keepdims=True)
    e = jnp.exp(logits - m)
    inv = pl.reciprocal(jnp.sum(e, axis=-1, keepdims=True), approx=False)

    # Compact store: only the real action columns go back to HBM.
    a = o_ref.shape[-1]
    o_ref[...] = e[:, :a] * inv


def _round_up(x, m):
    return ((x + m - 1) // m) * m


def actor_forward(state, params, *, max_batch_tile=2048):
    """state: [B, state_dim] f32 -> probs: [B, action_dim] f32.

    params = (w1, b1, w2, b2, w3, b3) with w_i: [in, out] f32, b_i: [1, out] f32.
    """
    w1, b1, w2, b2, w3, b3 = params
    batch, state_dim = state.shape
    hid1, hid2 = w1.shape[1], w2.shape[1]
    action_dim = w3.shape[1]

    # ---- host-side prep: lane-dense last layer + bf16 MXU weights ----------
    a_pad = _round_up(action_dim, _LANE)
    w3p = jnp.zeros((w3.shape[0], a_pad), jnp.float32).at[:, :action_dim].set(w3)
    b3p = jnp.full((1, a_pad), _NEG_FILL, jnp.float32).at[:, :action_dim].set(b3)
    w1b, w2b, w3b = (w.astype(jnp.bfloat16) for w in (w1, w2, w3p))

    # ---- batch tiling -------------------------------------------------------
    # Tile as large as practical but guarantee >= 2 grid steps when batch > 16
    # (v7x megacore), keep tb a multiple of 16 (bf16 sublane packing), and pad
    # rows to the tile.  Per-grid-step overhead ~0.35us, so large tiles win.
    tb = min(_round_up(max_batch_tile, 16), _round_up(-(-batch // 2), 16))
    tb = max(tb, 16)
    b_pad = _round_up(batch, tb)
    xb = state
    if b_pad != batch:
        xb = jnp.pad(xb, ((0, b_pad - batch), (0, 0)))
    xb = xb.astype(jnp.bfloat16)          # fused pad+convert; halves x DMA
    grid = (b_pad // tb,)

    cost = pl.CostEstimate(
        flops=2 * b_pad * (state_dim * hid1 + hid1 * hid2 + hid2 * a_pad),
        transcendentals=b_pad * a_pad,
        bytes_accessed=(xb.size * 2 + b_pad * action_dim * 4
                        + (w1b.size + w2b.size + w3b.size) * 2
                        + (b1.size + b2.size + b3p.size) * 4),
    )

    def resident(arr):  # full-array block, constant index_map -> stays in VMEM
        return pl.BlockSpec(arr.shape, lambda i: (0, 0))

    out = pl.pallas_call(
        actor_kernel,
        out_shape=jax.ShapeDtypeStruct((b_pad, action_dim), jnp.float32),
        grid=grid,
        in_specs=[
            pl.BlockSpec((tb, state_dim), lambda i: (i, 0)),  # x: batch-tiled
            resident(w1b), resident(b1),
            resident(w2b), resident(b2),
            resident(w3b), resident(b3p),
        ],
        # Compact output: block spans the full action_dim, so each batch tile's
        # writeback is one contiguous b*action_dim*4-byte HBM region.
        out_specs=pl.BlockSpec((tb, action_dim), lambda i: (i, 0)),
        compiler_params=pltpu.CompilerParams(
            dimension_semantics=("parallel",),
            vmem_limit_bytes=48 * 1024 * 1024),
        cost_estimate=cost,
    )(xb, w1b, b1, w2b, b2, w3b, b3p)

    return out if b_pad == batch else out[:batch]


def init_params(key, state_dim, action_dim):
    """Deterministic synthetic init (shapes match the PyTorch module)."""
    ks = jax.random.split(key, 6)

    def lin(kw, kb, fan_in, fan_out):
        bound = 1.0 / jnp.sqrt(jnp.float32(fan_in))
        w = jax.random.uniform(kw, (fan_in, fan_out), jnp.float32, -bound, bound)
        b = jax.random.uniform(kb, (1, fan_out), jnp.float32, -bound, bound)
        return w, b

    w1, b1 = lin(ks[0], ks[1], state_dim, 256)
    w2, b2 = lin(ks[2], ks[3], 256, 128)
    w3, b3 = lin(ks[4], ks[5], 128, action_dim)
    return (w1, b1, w2, b2, w3, b3)


def actor_reference_f32(state, params):
    """Pure-f32 reference (matches the PyTorch module numerics)."""
    w1, b1, w2, b2, w3, b3 = params
    h1 = jnp.maximum(state @ w1 + b1, 0.0)
    h2 = jnp.maximum(h1 @ w2 + b2, 0.0)
    return jax.nn.softmax(h2 @ w3 + b3, axis=-1)


def actor_reference_bf16(state, params):
    """Reference with the same bf16-MXU / f32-accumulate numerics as the kernel."""
    w1, b1, w2, b2, w3, b3 = params
    bf = jnp.bfloat16
    h1 = jnp.maximum(jnp.dot(state.astype(bf), w1.astype(bf),
                             preferred_element_type=jnp.float32) + b1, 0.0)
    h2 = jnp.maximum(jnp.dot(h1.astype(bf), w2.astype(bf),
                             preferred_element_type=jnp.float32) + b2, 0.0)
    logits = jnp.dot(h2.astype(bf), w3.astype(bf),
                     preferred_element_type=jnp.float32) + b3
    return jax.nn.softmax(logits, axis=-1)


if __name__ == "__main__":
    key = jax.random.PRNGKey(0)
    k_x, k_p = jax.random.split(key)

    # batch=24 with the default tiling -> tb=16, b_pad=32, grid=(2,): exercises
    # the >=2-step parallel batch grid, row padding, and the compact output.
    batch, state_dim, action_dim = 24, 32, 8
    state = jax.random.normal(k_x, (batch, state_dim), jnp.float32)
    params = init_params(k_p, state_dim, action_dim)

    out = actor_forward(state, params)
    out = jax.block_until_ready(out)
    assert out.shape == (batch, action_dim)

    # Tight check vs a reference with identical bf16-MXU numerics.
    ref_bf16 = actor_reference_bf16(state, params)
    assert jnp.allclose(out, ref_bf16, atol=1e-5, rtol=1e-5)

    # Loose check vs the full-f32 (PyTorch-equivalent) reference.
    ref_f32 = actor_reference_f32(state, params)
    assert jnp.allclose(out, ref_f32, atol=2e-2, rtol=2e-2)

    # Valid probability distributions.
    assert jnp.allclose(jnp.sum(out, axis=-1), 1.0, atol=1e-5)

    print("KERNEL_OK")
</pallas_src>

<mosaic_0001>
module attributes {stable_mosaic.version = 11 : i64} {
  func.func @actor_kernel(%arg0: i32, %arg1: memref<16x32xbf16, #tpu.memory_space<vmem>>, %arg2: memref<32x256xbf16, #tpu.memory_space<vmem>>, %arg3: memref<1x256xf32, #tpu.memory_space<vmem>>, %arg4: memref<256x128xbf16, #tpu.memory_space<vmem>>, %arg5: memref<1x128xf32, #tpu.memory_space<vmem>>, %arg6: memref<128x128xbf16, #tpu.memory_space<vmem>>, %arg7: memref<1x128xf32, #tpu.memory_space<vmem>>, %arg8: memref<16x8xf32, #tpu.memory_space<vmem>>) attributes {dimension_semantics = [#tpu.dimension_semantics<parallel>], iteration_bounds = array<i64: 2>, scalar_prefetch = 0 : i64, scratch_operands = 0 : i64, tpu.core_type = #tpu.core_type<tc>, window_params = [{transform_indices = @transform_0, window_bounds = array<i64: 16, 32>}, {pipeline_mode = #tpu.pipeline_mode<synchronous>, transform_indices = @transform_1, window_bounds = array<i64: 32, 256>}, {pipeline_mode = #tpu.pipeline_mode<synchronous>, transform_indices = @transform_2, window_bounds = array<i64: 1, 256>}, {pipeline_mode = #tpu.pipeline_mode<synchronous>, transform_indices = @transform_3, window_bounds = array<i64: 256, 128>}, {pipeline_mode = #tpu.pipeline_mode<synchronous>, transform_indices = @transform_4, window_bounds = array<i64: 1, 128>}, {pipeline_mode = #tpu.pipeline_mode<synchronous>, transform_indices = @transform_5, window_bounds = array<i64: 128, 128>}, {pipeline_mode = #tpu.pipeline_mode<synchronous>, transform_indices = @transform_6, window_bounds = array<i64: 1, 128>}, {transform_indices = @transform_7, window_bounds = array<i64: 16, 8>}]} {
    %c0 = arith.constant 0 : index
    %c0_0 = arith.constant 0 : index
    %0 = vector.load %arg1[%c0, %c0_0] : memref<16x32xbf16, #tpu.memory_space<vmem>>, vector<16x32xbf16>
    %c0_1 = arith.constant 0 : index
    %c0_2 = arith.constant 0 : index
    %1 = vector.load %arg2[%c0_1, %c0_2] : memref<32x256xbf16, #tpu.memory_space<vmem>>, vector<32x256xbf16>
    %cst = arith.constant dense<0.000000e+00> : vector<16x256xf32>
    %2 = tpu.matmul %0, %1, %cst {dimension_numbers = #tpu.dot_dimension_numbers<[1], [0], [0], [1], [0, 0, 1, 1], [], []>} : vector<16x32xbf16>, vector<32x256xbf16>, vector<16x256xf32> -> vector<16x256xf32>
    %c0_3 = arith.constant 0 : index
    %c0_4 = arith.constant 0 : index
    %3 = vector.load %arg3[%c0_3, %c0_4] : memref<1x256xf32, #tpu.memory_space<vmem>>, vector<1x256xf32>
    %4 = vector.broadcast %3 : vector<1x256xf32> to vector<16x256xf32>
    %5 = arith.addf %2, %4 : vector<16x256xf32>
    %cst_5 = arith.constant 0.000000e+00 : f32
    %6 = vector.broadcast %cst_5 : f32 to vector<16x256xf32>
    %7 = arith.maximumf %5, %6 : vector<16x256xf32>
    %8 = arith.truncf %7 : vector<16x256xf32> to vector<16x256xbf16>
    %c0_6 = arith.constant 0 : index
    %c0_7 = arith.constant 0 : index
    %9 = vector.load %arg4[%c0_6, %c0_7] : memref<256x128xbf16, #tpu.memory_space<vmem>>, vector<256x128xbf16>
    %cst_8 = arith.constant dense<0.000000e+00> : vector<16x128xf32>
    %10 = tpu.matmul %8, %9, %cst_8 {dimension_numbers = #tpu.dot_dimension_numbers<[1], [0], [0], [1], [0, 0, 1, 1], [], []>} : vector<16x256xbf16>, vector<256x128xbf16>, vector<16x128xf32> -> vector<16x128xf32>
    %c0_9 = arith.constant 0 : index
    %c0_10 = arith.constant 0 : index
    %11 = vector.load %arg5[%c0_9, %c0_10] : memref<1x128xf32, #tpu.memory_space<vmem>>, vector<1x128xf32>
    %12 = vector.broadcast %11 : vector<1x128xf32> to vector<16x128xf32>
    %13 = arith.addf %10, %12 : vector<16x128xf32>
    %cst_11 = arith.constant 0.000000e+00 : f32
    %14 = vector.broadcast %cst_11 : f32 to vector<16x128xf32>
    %15 = arith.maximumf %13, %14 : vector<16x128xf32>
    %16 = arith.truncf %15 : vector<16x128xf32> to vector<16x128xbf16>
    %c0_12 = arith.constant 0 : index
    %c0_13 = arith.constant 0 : index
    %17 = vector.load %arg6[%c0_12, %c0_13] : memref<128x128xbf16, #tpu.memory_space<vmem>>, vector<128x128xbf16>
    %cst_14 = arith.constant dense<0.000000e+00> : vector<16x128xf32>
    %18 = tpu.matmul %16, %17, %cst_14 {dimension_numbers = #tpu.dot_dimension_numbers<[1], [0], [0], [1], [0, 0, 1, 1], [], []>} : vector<16x128xbf16>, vector<128x128xbf16>, vector<16x128xf32> -> vector<16x128xf32>
    %c0_15 = arith.constant 0 : index
    %c0_16 = arith.constant 0 : index
    %19 = vector.load %arg7[%c0_15, %c0_16] : memref<1x128xf32, #tpu.memory_space<vmem>>, vector<1x128xf32>
    %20 = vector.broadcast %19 : vector<1x128xf32> to vector<16x128xf32>
    %21 = arith.addf %18, %20 : vector<16x128xf32>
    %cst_17 = arith.constant dense<0xFF800000> : vector<16xf32>
    %22 = vector.multi_reduction <maximumf>, %21, %cst_17 [1] : vector<16x128xf32> to vector<16xf32>
    %23 = vector.shape_cast %22 : vector<16xf32> to vector<16x1xf32>
    %24 = vector.broadcast %23 : vector<16x1xf32> to vector<16x128xf32>
    %25 = arith.subf %21, %24 : vector<16x128xf32>
    %26 = math.exp %25 : vector<16x128xf32>
    %cst_18 = arith.constant dense<0.000000e+00> : vector<16xf32>
    %27 = vector.multi_reduction <add>, %26, %cst_18 [1] : vector<16x128xf32> to vector<16xf32>
    %28 = vector.shape_cast %27 : vector<16xf32> to vector<16x1xf32>
    %29 = tpu.reciprocal %28 : vector<16x1xf32> -> vector<16x1xf32>
    %30 = vector.extract_strided_slice %26 {offsets = [0, 0], sizes = [16, 8], strides = [1, 1]} : vector<16x128xf32> to vector<16x8xf32>
    %31 = vector.broadcast %29 : vector<16x1xf32> to vector<16x8xf32>
    %32 = arith.mulf %30, %31 : vector<16x8xf32>
    %c0_19 = arith.constant 0 : index
    %c0_20 = arith.constant 0 : index
    %33 = vector.load %arg8[%c0_19, %c0_20] : memref<16x8xf32, #tpu.memory_space<vmem>>, vector<16x8xf32>
    tpu.vector_store %arg8[%c0_19, %c0_20], %32 {strides = array<i32>} : memref<16x8xf32, #tpu.memory_space<vmem>>, vector<16x8xf32>,
    return
  }
  func.func @transform_0(%arg0: i32) -> (i32, i32) {
    %c0_i32 = arith.constant 0 : i32
    %c0_i32_0 = arith.constant 0 : i32
    return %arg0, %c0_i32 : i32, i32
  }
  func.func @transform_1(%arg0: i32) -> (i32, i32) {
    %c0_i32 = arith.constant 0 : i32
    %c0_i32_0 = arith.constant 0 : i32
    %c0_i32_1 = arith.constant 0 : i32
    return %c0_i32, %c0_i32_0 : i32, i32
  }
  func.func @transform_2(%arg0: i32) -> (i32, i32) {
    %c0_i32 = arith.constant 0 : i32
    %c0_i32_0 = arith.constant 0 : i32
    %c0_i32_1 = arith.constant 0 : i32
    return %c0_i32, %c0_i32_0 : i32, i32
  }
  func.func @transform_3(%arg0: i32) -> (i32, i32) {
    %c0_i32 = arith.constant 0 : i32
    %c0_i32_0 = arith.constant 0 : i32
    %c0_i32_1 = arith.constant 0 : i32
    return %c0_i32, %c0_i32_0 : i32, i32
  }
  func.func @transform_4(%arg0: i32) -> (i32, i32) {
    %c0_i32 = arith.constant 0 : i32
    %c0_i32_0 = arith.constant 0 : i32
    %c0_i32_1 = arith.constant 0 : i32
    return %c0_i32, %c0_i32_0 : i32, i32
  }
  func.func @transform_5(%arg0: i32) -> (i32, i32) {
    %c0_i32 = arith.constant 0 : i32
    %c0_i32_0 = arith.constant 0 : i32
    %c0_i32_1 = arith.constant 0 : i32
    return %c0_i32, %c0_i32_0 : i32, i32
  }
  func.func @transform_6(%arg0: i32) -> (i32, i32) {
    %c0_i32 = arith.constant 0 : i32
    %c0_i32_0 = arith.constant 0 : i32
    %c0_i32_1 = arith.constant 0 : i32
    return %c0_i32, %c0_i32_0 : i32, i32
  }
  func.func @transform_7(%arg0: i32) -> (i32, i32) {
    %c0_i32 = arith.constant 0 : i32
    %c0_i32_0 = arith.constant 0 : i32
    return %arg0, %c0_i32 : i32, i32
  }
}

</mosaic_0001>

<llo_original>
// kernel: tpu_custom_call.1
$region0: #{tpu_custom_call.1}
  #allocation0 [shape = 'u32[]', space=smem, size = 0x4, offset = 0x4, fixed_abs, tag = 'smem constant byte address 0x4 - core index']
  #allocation1 [shape = 'u32[144,128]{1,0:T(1,128)}', space=vmem, size = 0x12000, scoped, tag = 'internal scratch']
  %s0 = inlined_call_operand.hbm [shape: bf16[32,32], index: 0, kind: input, shape index: {}]
  %s1 = inlined_call_operand.hbm [shape: bf16[32,256], index: 1, kind: input, shape index: {}]
  %s2 = inlined_call_operand.vmem [shape: f32[1,256], index: 2, kind: input, shape index: {}]
  %s3 = inlined_call_operand.hbm [shape: bf16[256,128], index: 3, kind: input, shape index: {}]
  %s4 = inlined_call_operand.vmem [shape: f32[1,128], index: 4, kind: input, shape index: {}]
  %s5 = inlined_call_operand.hbm [shape: bf16[128,128], index: 5, kind: input, shape index: {}]
  %s6 = inlined_call_operand.vmem [shape: f32[1,128], index: 6, kind: input, shape index: {}]
  %s7 = inlined_call_operand.vmem [shape: f32[32,8], index: 7, kind: output, shape index: {}]
  %s8 = sld [smem:[#allocation0]]
  $region77: #{tpu_custom_call.1} parent=0
    _
  %s10 = ssub.s32 1, %s8
  %s11 = scalar_select 0, %s10, %s8
  $region1: #{tpu_custom_call.1} parent=0
    #allocation2 [shape = 'u8[8192]{0}', space=vmem, size = 0x2000, scoped, tag = 'input window, operand 0']
    #allocation3 [shape = 's32[2]{0}', space=sflag, size = 0x8, scoped, tag = 'scoped memory for tpu_custom_call.1']
    #allocation4 [shape = 'u8[16384]{0}', space=vmem, size = 0x4000, scoped, tag = 'input window, operand 1, single buffered']
    #allocation5 [shape = 's32[1]{0}', space=sflag, size = 0x4, scoped, tag = 'scoped memory for tpu_custom_call.1']
    #allocation6 [shape = 'u8[65536]{0}', space=vmem, size = 0x10000, scoped, tag = 'input window, operand 3, single buffered']
    #allocation7 [shape = 'u8[32768]{0}', space=vmem, size = 0x8000, scoped, tag = 'input window, operand 5, single buffered']
    #allocation8 [shape = 's32[1]{0}', space=sflag, size = 0x4, scoped, tag = 'scoped memory for tpu_custom_call.1']
    %12 = vsyncpa [#allocation3], 0
    %s13 = scalar_lea.sflag [#allocation3], 1
    %14 = vsyncpa %s13, 0
    %15 = vsyncpa [#allocation5], 0
    %16 = vsyncpa [#allocation8], 0
    loop: start=0, step=1, limit=4
    $region2: #{tpu_custom_call.1} parent=1 // loop_pre_header
      _
    $region3: #{tpu_custom_call.1} parent=1 // loop_header
      %s18 = sphi 0, %s22
      %p19 = scmp.ge.s32.totalorder %s18, 4
      %s28 = sphi 0, %s30
      %s31 = sphi 0, %s28
      %s32 = sphi 0, %s31
      %s48 = sphi 0, %s32
      %s52 = sphi 0, %s52
      %s54 = sphi 0, %s52
      %s55 = sphi 0, %s54
      %s69 = sphi 0, %s55
      %s73 = sphi 0, %s73
      %s75 = sphi 0, %s73
      %s76 = sphi 0, %s75
      %s90 = sphi 0, %s76
      %s94 = sphi 0, %s94
      %s96 = sphi 0, %s94
      %s97 = sphi 0, %s96
      %s111 = sphi 0, %s97
      %s115 = sphi 0, %s115
      %s117 = sphi 0, %s115
      %s118 = sphi 0, %s117
      %s132 = sphi 0, %s118
      %s136 = sphi 0, %s136
      %s138 = sphi 0, %s136
      %s139 = sphi 0, %s138
      %s153 = sphi 0, %s139
      %s157 = sphi 0, %s157
      %s159 = sphi 0, %s157
      %s160 = sphi 0, %s159
      %s174 = sphi 0, %s160
      %s180 = sphi 0, %s182
      %s183 = sphi 0, %s180
      %s184 = sphi 0, %s183
      %s200 = sphi 0, %s184
    $region4: #{tpu_custom_call.1} parent=1 // loop_header_branch
      %21 = sbr.rel (%p19) target = $region8
    $region5: #{tpu_custom_call.1} parent=1 // loop_body
      %s23 = ssub.s32 %s18, 1
      %s24 = ssub.s32 %s18, 2
      %s25 = sadd.s32 %s18, 1
      %s26 = ssub.s32 %s18, %s25
      %p27 = scmp.eq.s32.totalorder %s26, 0
      %s29 = sadd.s32 %s28, 1
      %s30 = scalar_select %p27, %s28, %s29
      %p33 = pneg %p27
      %p34 = scmp.eq.s32.totalorder %s18, 1
      %p35 = por %p33, %p34
      %p36 = scmp.ne.s32.totalorder %s28, %s31
      %p37 = scmp.eq.s32.totalorder %s18, 0
      %p38 = por %p36, %p37
      %p39 = scmp.ne.s32.totalorder %s28, %s31
      %p40 = scmp.eq.s32.totalorder %s23, 1
      %p41 = por %p39, %p40
      %p42 = scmp.ne.s32.totalorder %s31, %s32
      %p43 = scmp.eq.s32.totalorder %s23, 0
      %p44 = por %p42, %p43
      %p45 = scmp.ne.s32.totalorder %s31, %s32
      %p46 = scmp.eq.s32.totalorder %s24, 1
      %p47 = por %p45, %p46
      %p49 = scmp.ne.s32.totalorder %s32, %s48
      %p50 = scmp.eq.s32.totalorder %s24, 0
      %p51 = por %p49, %p50
      %s53 = sadd.s32 %s52, 1
      %p56 = scmp.eq.s32.totalorder %s18, 1
      %p57 = scmp.ne.s32.totalorder %s52, %s54
      %p58 = scmp.eq.s32.totalorder %s18, 0
      %p59 = por %p57, %p58
      %p60 = scmp.ne.s32.totalorder %s52, %s54
      %p61 = scmp.eq.s32.totalorder %s23, 1
      %p62 = por %p60, %p61
      %p63 = scmp.ne.s32.totalorder %s54, %s55
      %p64 = scmp.eq.s32.totalorder %s23, 0
      %p65 = por %p63, %p64
      %p66 = scmp.ne.s32.totalorder %s54, %s55
      %p67 = scmp.eq.s32.totalorder %s24, 1
      %p68 = por %p66, %p67
      %p70 = scmp.ne.s32.totalorder %s55, %s69
      %p71 = scmp.eq.s32.totalorder %s24, 0
      %p72 = por %p70, %p71
      %s74 = sadd.s32 %s73, 1
      %p77 = scmp.eq.s32.totalorder %s18, 1
      %p78 = scmp.ne.s32.totalorder %s73, %s75
      %p79 = scmp.eq.s32.totalorder %s18, 0
      %p80 = por %p78, %p79
      %p81 = scmp.ne.s32.totalorder %s73, %s75
      %p82 = scmp.eq.s32.totalorder %s23, 1
      %p83 = por %p81, %p82
      %p84 = scmp.ne.s32.totalorder %s75, %s76
      %p85 = scmp.eq.s32.totalorder %s23, 0
      %p86 = por %p84, %p85
      %p87 = scmp.ne.s32.totalorder %s75, %s76
      %p88 = scmp.eq.s32.totalorder %s24, 1
      %p89 = por %p87, %p88
      %p91 = scmp.ne.s32.totalorder %s76, %s90
      %p92 = scmp.eq.s32.totalorder %s24, 0
      %p93 = por %p91, %p92
      %s95 = sadd.s32 %s94, 1
      %p98 = scmp.eq.s32.totalorder %s18, 1
      %p99 = scmp.ne.s32.totalorder %s94, %s96
      %p100 = scmp.eq.s32.totalorder %s18, 0
      %p101 = por %p99, %p100
      %p102 = scmp.ne.s32.totalorder %s94, %s96
      %p103 = scmp.eq.s32.totalorder %s23, 1
      %p104 = por %p102, %p103
      %p105 = scmp.ne.s32.totalorder %s96, %s97
      %p106 = scmp.eq.s32.totalorder %s23, 0
      %p107 = por %p105, %p106
      %p108 = scmp.ne.s32.totalorder %s96, %s97
      %p109 = scmp.eq.s32.totalorder %s24, 1
      %p110 = por %p108, %p109
      %p112 = scmp.ne.s32.totalorder %s97, %s111
      %p113 = scmp.eq.s32.totalorder %s24, 0
      %p114 = por %p112, %p113
      %s116 = sadd.s32 %s115, 1
      %p119 = scmp.eq.s32.totalorder %s18, 1
      %p120 = scmp.ne.s32.totalorder %s115, %s117
      %p121 = scmp.eq.s32.totalorder %s18, 0
      %p122 = por %p120, %p121
      %p123 = scmp.ne.s32.totalorder %s115, %s117
      %p124 = scmp.eq.s32.totalorder %s23, 1
      %p125 = por %p123, %p124
      %p126 = scmp.ne.s32.totalorder %s117, %s118
      %p127 = scmp.eq.s32.totalorder %s23, 0
      %p128 = por %p126, %p127
      %p129 = scmp.ne.s32.totalorder %s117, %s118
      %p130 = scmp.eq.s32.totalorder %s24, 1
      %p131 = por %p129, %p130
      %p133 = scmp.ne.s32.totalorder %s118, %s132
      %p134 = scmp.eq.s32.totalorder %s24, 0
      %p135 = por %p133, %p134
      %s137 = sadd.s32 %s136, 1
      %p140 = scmp.eq.s32.totalorder %s18, 1
      %p141 = scmp.ne.s32.totalorder %s136, %s138
      %p142 = scmp.eq.s32.totalorder %s18, 0
      %p143 = por %p141, %p142
      %p144 = scmp.ne.s32.totalorder %s136, %s138
      %p145 = scmp.eq.s32.totalorder %s23, 1
      %p146 = por %p144, %p145
      %p147 = scmp.ne.s32.totalorder %s138, %s139
      %p148 = scmp.eq.s32.totalorder %s23, 0
      %p149 = por %p147, %p148
      %p150 = scmp.ne.s32.totalorder %s138, %s139
      %p151 = scmp.eq.s32.totalorder %s24, 1
      %p152 = por %p150, %p151
      %p154 = scmp.ne.s32.totalorder %s139, %s153
      %p155 = scmp.eq.s32.totalorder %s24, 0
      %p156 = por %p154, %p155
      %s158 = sadd.s32 %s157, 1
      %p161 = scmp.eq.s32.totalorder %s18, 1
      %p162 = scmp.ne.s32.totalorder %s157, %s159
      %p163 = scmp.eq.s32.totalorder %s18, 0
      %p164 = por %p162, %p163
      %p165 = scmp.ne.s32.totalorder %s157, %s159
      %p166 = scmp.eq.s32.totalorder %s23, 1
      %p167 = por %p165, %p166
      %p168 = scmp.ne.s32.totalorder %s159, %s160
      %p169 = scmp.eq.s32.totalorder %s23, 0
      %p170 = por %p168, %p169
      %p171 = scmp.ne.s32.totalorder %s159, %s160
      %p172 = scmp.eq.s32.totalorder %s24, 1
      %p173 = por %p171, %p172
      %p175 = scmp.ne.s32.totalorder %s160, %s174
      %p176 = scmp.eq.s32.totalorder %s24, 0
      %p177 = por %p175, %p176
      %s178 = ssub.s32 %s18, %s25
      %p179 = scmp.eq.s32.totalorder %s178, 0
      %s181 = sadd.s32 %s180, 1
      %s182 = scalar_select %p179, %s180, %s181
      %p185 = pneg %p179
      %p186 = scmp.eq.s32.totalorder %s18, 1
      %p187 = por %p185, %p186
      %p188 = scmp.ne.s32.totalorder %s180, %s183
      %p189 = scmp.eq.s32.totalorder %s18, 0
      %p190 = por %p188, %p189
      %p191 = scmp.ne.s32.totalorder %s180, %s183
      %p192 = scmp.eq.s32.totalorder %s23, 1
      %p193 = por %p191, %p192
      %p194 = scmp.ne.s32.totalorder %s183, %s184
      %p195 = scmp.eq.s32.totalorder %s23, 0
      %p196 = por %p194, %p195
      %p197 = scmp.ne.s32.totalorder %s183, %s184
      %p198 = scmp.eq.s32.totalorder %s24, 1
      %p199 = por %p197, %p198
      %p201 = scmp.ne.s32.totalorder %s184, %s200
      %p202 = scmp.eq.s32.totalorder %s24, 0
      %p203 = por %p201, %p202
      %p204 = scmp.le.s32.totalorder 1, %s18
      %p205 = scmp.lt.s32.totalorder %s18, 3
      %p206 = pnand %p204, %p205
      %p207 = pneg %p206
      // Predicated region
      $region9: #{tpu_custom_call.1} parent=5 // pred_check
        _
      $region10: #{tpu_custom_call.1} parent=5 // pred_check_branch
        %209 = sbr.rel (%p206) target = $region12
      $region11: #{tpu_custom_call.1} parent=5 // pred_region
        %s210 = ssub.s32 %s18, 1
        // Predicated region
        $region13: #{tpu_custom_call.1} parent=11 // pred_check
          %p211 = pneg %p65
        $region14: #{tpu_custom_call.1} parent=11 // pred_check_branch
          %213 = sbr.rel (%p211) target = $region16
        $region15: #{tpu_custom_call.1} parent=11 // pred_region
          %s215 = ssub.s32 512, 512
          %216 = vsyncadd [#allocation5], %s215
          %s217 = sshll.u32 [#allocation4], 4
          %s218 = int_to_ptr.vmem [resolvable:$true] %s217
          %223 = dma.hbm_to_vmem [thread:$0]  %s1, 512, %s218, [#allocation5], 128, 128, 8
        $region16: #{tpu_custom_call.1} parent=11 // pred_fallthru
          _
        // Predicated region
        $region17: #{tpu_custom_call.1} parent=11 // pred_check
          %p224 = pneg %p86
        $region18: #{tpu_custom_call.1} parent=11 // pred_check_branch
          %226 = sbr.rel (%p224) target = $region20
        $region19: #{tpu_custom_call.1} parent=11 // pred_region
          _
        $region20: #{tpu_custom_call.1} parent=11 // pred_fallthru
          _
        // Predicated region
        $region21: #{tpu_custom_call.1} parent=11 // pred_check
          %p227 = pneg %p107
        $region22: #{tpu_custom_call.1} parent=11 // pred_check_branch
          %229 = sbr.rel (%p227) target = $region24
        $region23: #{tpu_custom_call.1} parent=11 // pred_region
          %s231 = ssub.s32 2048, 2048
          %232 = vsyncadd [#allocation5], %s231
          %s233 = sshll.u32 [#allocation6], 4
          %s234 = int_to_ptr.vmem [resolvable:$true] %s233
          %239 = dma.hbm_to_vmem [thread:$0]  %s3, 2048, %s234, [#allocation5], 64, 64, 4
        $region24: #{tpu_custom_call.1} parent=11 // pred_fallthru
          _
        // Predicated region
        $region25: #{tpu_custom_call.1} parent=11 // pred_check
          %p240 = pneg %p128
        $region26: #{tpu_custom_call.1} parent=11 // pred_check_branch
          %242 = sbr.rel (%p240) target = $region28
        $region27: #{tpu_custom_call.1} parent=11 // pred_region
          _
        $region28: #{tpu_custom_call.1} parent=11 // pred_fallthru
          _
        // Predicated region
        $region29: #{tpu_custom_call.1} parent=11 // pred_check
          %p243 = pneg %p149
        $region30: #{tpu_custom_call.1} parent=11 // pred_check_branch
          %245 = sbr.rel (%p243) target = $region32
        $region31: #{tpu_custom_call.1} parent=11 // pred_region
          %s247 = ssub.s32 1024, 1024
          %248 = vsyncadd [#allocation8], %s247
          %s249 = sshll.u32 [#allocation7], 4
          %s250 = int_to_ptr.vmem [resolvable:$true] %s249
          %255 = dma.hbm_to_vmem [thread:$0]  %s5, 1024, %s250, [#allocation8], 64, 64, 4
        $region32: #{tpu_custom_call.1} parent=11 // pred_fallthru
          _
        // Predicated region
        $region33: #{tpu_custom_call.1} parent=11 // pred_check
          %p256 = pneg %p170
        $region34: #{tpu_custom_call.1} parent=11 // pred_check_branch
          %258 = sbr.rel (%p256) target = $region36
        $region35: #{tpu_custom_call.1} parent=11 // pred_region
          _
        $region36: #{tpu_custom_call.1} parent=11 // pred_fallthru
          _
      $region12: #{tpu_custom_call.1} parent=5 // pred_fallthru
        _
      %p259 = scmp.lt.s32.totalorder %s18, 2
      // Predicated region
      $region37: #{tpu_custom_call.1} parent=5 // pred_check
        %p260 = pneg %p259
      $region38: #{tpu_custom_call.1} parent=5 // pred_check_branch
        %262 = sbr.rel (%p260) target = $region40
      $region39: #{tpu_custom_call.1} parent=5 // pred_region
        // Predicated region
        $region41: #{tpu_custom_call.1} parent=39 // pred_check
          %p263 = pneg %p38
        $region42: #{tpu_custom_call.1} parent=39 // pred_check_branch
          %265 = sbr.rel (%p263) target = $region44
        $region43: #{tpu_custom_call.1} parent=39 // pred_region
          %s266 = sand.u32 %s28, 1
          %s267 = scalar_lea.sflag [#allocation3], %s266
          %s268 = sand.u32 %s28, 1
          %s269 = smul.addr %s268, 8
          %s270 = scalar_lea.vmem [#allocation2], %s269
          %s271 = smul.u32 2, %s18
          %s273 = ssub.s32 128, 128
          %274 = vsyncadd %s267, %s273
          %s275 = smul.addr %s271, 64
          %s276 = scalar_lea.hbm %s0, %s275
          %s277 = sshll.u32 %s270, 4
          %s278 = int_to_ptr.vmem [resolvable:$true] %s277
          %283 = dma.hbm_to_vmem [thread:$0]  %s276, 128, %s278, %s267, 64, 64, 4
        $region44: #{tpu_custom_call.1} parent=39 // pred_fallthru
          _
      $region40: #{tpu_custom_call.1} parent=5 // pred_fallthru
        _
      %p284 = scmp.le.s32.totalorder 1, %s18
      %p285 = scmp.lt.s32.totalorder %s18, 3
      %p286 = pnand %p284, %p285
      %p287 = pneg %p286
      // Predicated region
      $region45: #{tpu_custom_call.1} parent=5 // pred_check
        _
      $region46: #{tpu_custom_call.1} parent=5 // pred_check_branch
        %289 = sbr.rel (%p286) target = $region48
      $region47: #{tpu_custom_call.1} parent=5 // pred_region
        %s290 = ssub.s32 %s18, 1
        %s291 = sand.u32 %s31, 1
        %s292 = scalar_lea.sflag [#allocation3], %s291
        %s293 = sand.u32 %s31, 1
        %s294 = smul.addr %s293, 8
        %s295 = scalar_lea.vmem [#allocation2], %s294
        // Predicated region
        $region49: #{tpu_custom_call.1} parent=47 // pred_check
          %p296 = pneg %p44
        $region50: #{tpu_custom_call.1} parent=47 // pred_check_branch
          %298 = sbr.rel (%p296) target = $region52
        $region51: #{tpu_custom_call.1} parent=47 // pred_region
          %299 = dma.done %s292, 128
        $region52: #{tpu_custom_call.1} parent=47 // pred_fallthru
          _
        // Predicated region
        $region53: #{tpu_custom_call.1} parent=47 // pred_check
          %p300 = pneg %p65
        $region54: #{tpu_custom_call.1} parent=47 // pred_check_branch
          %302 = sbr.rel (%p300) target = $region56
        $region55: #{tpu_custom_call.1} parent=47 // pred_region
          %303 = dma.done [#allocation5], 512
        $region56: #{tpu_custom_call.1} parent=47 // pred_fallthru
          _
        // Predicated region
        $region57: #{tpu_custom_call.1} parent=47 // pred_check
          %p304 = pneg %p107
        $region58: #{tpu_custom_call.1} parent=47 // pred_check_branch
          %306 = sbr.rel (%p304) target = $region60
        $region59: #{tpu_custom_call.1} parent=47 // pred_region
          %307 = dma.done [#allocation5], 2048
        $region60: #{tpu_custom_call.1} parent=47 // pred_fallthru
          _
        // Predicated region
        $region61: #{tpu_custom_call.1} parent=47 // pred_check
          %p308 = pneg %p149
        $region62: #{tpu_custom_call.1} parent=47 // pred_check_branch
          %310 = sbr.rel (%p308) target = $region64
        $region63: #{tpu_custom_call.1} parent=47 // pred_region
          %311 = dma.done [#allocation8], 1024
        $region64: #{tpu_custom_call.1} parent=47 // pred_fallthru
          _
        %s312 = sand.u32 %s31, 1
        %s313 = scalar_lea.sflag [#allocation3], %s312
        %s314 = sand.u32 %s31, 1
        %s315 = smul.addr %s314, 8
        %s316 = scalar_lea.vmem [#allocation2], %s315
        %p317 = pneg %p44
        %p318 = pneg %p41
        %p319 = pneg %p65
        %p320 = pneg %p62
        %p321 = pneg %p86
        %p322 = pneg %p83
        %p323 = pneg %p107
        %p324 = pneg %p104
        %p325 = pneg %p128
        %p326 = pneg %p125
        %p327 = pneg %p149
        %p328 = pneg %p146
        %p329 = pneg %p170
        %p330 = pneg %p167
        %p331 = pneg %p196
        %p332 = pneg %p193
        %s333 = smul.u32 2, %s23
        %p334 = scmp.lt.s32.totalorder %s333, 3
        %s335 = scalar_select %p334, %s333, 3
        %s336 = smul.addr %s335, 8
        %s337 = scalar_lea.vmem %s7, %s336
        %s338 = smul.u32 2, %s23
        %s339 = smul.u32 2, %s23
        %p340 = scmp.lt.s32.totalorder %s339, 3
        %s341 = scalar_select %p340, %s339, 3
        %s342 = smul.addr %s341, 8
        %s343 = scalar_lea.vmem %s7, %s342
        %s344 = smul.u32 2, %s23
        %v346 = vld [vmem:[%s295] sm:$0xf]
        %v347 = vld [vmem:[%s295 + $0x4] sm:$0xf]
        %v348 = vld [vmem:[#allocation4] sm:$0xff]
        %v349 = vld [vmem:[#allocation4 + $0x8] sm:$0xff]
        %v350 = vld [vmem:[#allocation4 + $0x10] sm:$0xff]
        %v351 = vld [vmem:[#allocation4 + $0x18] sm:$0xff]
        %v352 = vld [vmem:[%s2] sm:$0x3]
        %v354 = vlaneseq
        %v355 = vshrl.u32 %v354, 7
        %v356 = vsub.s32 0, %v355
        %v357 = vrot.slane %v352, %v356
        %v358 = vlaneseq
        %v359 = vshrl.u32 %v358, 7
        %v360 = vsub.s32 1, %v359
        %v361 = vrot.slane %v352, %v360
        %v366 = vunpack.c.l.b16 %v346
        %v367 = vunpack.c.l.b16 %v347
        %v368 = vpack.c.b16 %v367, %v366
        %v373 = vunpack.c.l.b16 %v348
        %v374 = vunpack.c.h.b16 %v348
        %v375 = vunpack.c.l.b16 %v349
        %v376 = vunpack.c.h.b16 %v349
        %v377 = vunpack.c.l.b16 %v350
        %v378 = vunpack.c.h.b16 %v350
        %v379 = vunpack.c.l.b16 %v351
        %v380 = vunpack.c.h.b16 %v351
        %v381 = vpack.c.b16 %v375, %v373
        %v382 = vpack.c.b16 %v376, %v374
        %v383 = vpack.c.b16 %v379, %v377
        %v384 = vpack.c.b16 %v380, %v378
        %vm389 = vcmask 261120
        %v391 = vsel %vm389, %v368, 0
        %393 = vmatprep.subr.bf16.mxu0 %v382
        %394 = vmatpush1.bf16.msra.mxu0 %v381
        %395 = vmatprep.subr.bf16.mxu0 %v384
        %396 = vmatpush1.bf16.msra.mxu0 %v383
        %397 = vmatprep.subr.bf16.mxu0 0
        %398 = vmatpush1.bf16.msra.mxu0 0
        %399 = vmatprep.subr.bf16.mxu0 0
        %400 = vmatpush1.bf16.msra.mxu0 0
        %401 = vmatprep.subr.bf16.mxu0 0
        %402 = vmatpush1.bf16.msra.mxu0 0
        %403 = vmatprep.subr.bf16.mxu0 0
        %404 = vmatpush1.bf16.msra.mxu0 0
        %405 = vmatprep.subr.bf16.mxu0 0
        %406 = vmatpush1.bf16.msra.mxu0 0
        %407 = vmatprep.subr.bf16.mxu0 0
        %408 = vmatpush1.bf16.msra.mxu0 0
        %409 = vmatprep.subr.bf16.mxu0 0
        %410 = vmatpush1.bf16.msra.mxu0 0
        %411 = vmatprep.subr.bf16.mxu0 0
        %412 = vmatpush1.bf16.msra.mxu0 0
        %413 = vmatprep.subr.bf16.mxu0 0
        %414 = vmatpush1.bf16.msra.mxu0 0
        %415 = vmatprep.subr.bf16.mxu0 0
        %416 = vmatpush1.bf16.msra.mxu0 0
        %417 = vmatprep.subr.bf16.mxu0 0
        %418 = vmatpush1.bf16.msra.mxu0 0
        %419 = vmatprep.subr.bf16.mxu0 0
        %420 = vmatpush1.bf16.msra.mxu0 0
        %421 = vmatprep.subr.bf16.mxu0 0
        %422 = vmatpush1.bf16.msra.mxu0 0
        %423 = vmatprep.subr.bf16.mxu0 0
        %424 = vmatpush1.bf16.msra.mxu0 0
        %425 = vmatprep.mubr.bf16.mxu0 0
        %426 = vmatmul.mubr.bf16.gmra.mrb[0].mxu0 %v391
        %v427 = vpop.f32.mrb[0].mxu0
        %v428 = vadd.f32 %v357, %v427
        %v429 = vpop.f32.mrb[0].mxu0
        %v430 = vadd.f32 %v361, %v429
        %v431 = vpop.f32.mrb[0].mxu0
        %v432 = vadd.f32 %v357, %v431
        %v433 = vpop.f32.mrb[0].mxu0
        %v434 = vadd.f32 %v361, %v433
        %435 = vdwg.mxu0
        %v436 = vmax.f32 %v428, 0.0
        %v437 = vmax.f32 %v430, 0.0
        %v438 = vmax.f32 %v432, 0.0
        %v439 = vmax.f32 %v434, 0.0
        %v440 = vpack.c.bf16 %v438, %v436
        %v441 = vpack.c.bf16 %v439, %v437
        %v442 = vld [vmem:[#allocation6] sm:$0xf]
        %v443 = vld [vmem:[#allocation6 + $0x4] sm:$0xf]
        %v444 = vld [vmem:[#allocation6 + $0x8] sm:$0xf]
        %v445 = vld [vmem:[#allocation6 + $0xc] sm:$0xf]
        %v446 = vld [vmem:[#allocation6 + $0x10] sm:$0xf]
        %v447 = vld [vmem:[#allocation6 + $0x14] sm:$0xf]
        %v448 = vld [vmem:[#allocation6 + $0x18] sm:$0xf]
        %v449 = vld [vmem:[#allocation6 + $0x1c] sm:$0xf]
        %v450 = vld [vmem:[#allocation6 + $0x20] sm:$0xf]
        %v451 = vld [vmem:[#allocation6 + $0x24] sm:$0xf]
        %v452 = vld [vmem:[#allocation6 + $0x28] sm:$0xf]
        %v453 = vld [vmem:[#allocation6 + $0x2c] sm:$0xf]
        %v454 = vld [vmem:[#allocation6 + $0x30] sm:$0xf]
        %v455 = vld [vmem:[#allocation6 + $0x34] sm:$0xf]
        %v456 = vld [vmem:[#allocation6 + $0x38] sm:$0xf]
        %v457 = vld [vmem:[#allocation6 + $0x3c] sm:$0xf]
        %v458 = vld [vmem:[#allocation6 + $0x40] sm:$0xf]
        %v459 = vld [vmem:[#allocation6 + $0x44] sm:$0xf]
        %v460 = vld [vmem:[#allocation6 + $0x48] sm:$0xf]
        %v461 = vld [vmem:[#allocation6 + $0x4c] sm:$0xf]
        %v462 = vld [vmem:[#allocation6 + $0x50] sm:$0xf]
        %v463 = vld [vmem:[#allocation6 + $0x54] sm:$0xf]
        %v464 = vld [vmem:[#allocation6 + $0x58] sm:$0xf]
        %v465 = vld [vmem:[#allocation6 + $0x5c] sm:$0xf]
        %v466 = vld [vmem:[#allocation6 + $0x60] sm:$0xf]
        %v467 = vld [vmem:[#allocation6 + $0x64] sm:$0xf]
        %v468 = vld [vmem:[#allocation6 + $0x68] sm:$0xf]
        %v469 = vld [vmem:[#allocation6 + $0x6c] sm:$0xf]
        %v470 = vld [vmem:[#allocation6 + $0x70] sm:$0xf]
        %v471 = vld [vmem:[#allocation6 + $0x74] sm:$0xf]
        %v472 = vld [vmem:[#allocation6 + $0x78] sm:$0xf]
        %v473 = vld [vmem:[#allocation6 + $0x7c] sm:$0xf]
        %v474 = vld [vmem:[%s4] sm:$0x1]
        %v476 = vlaneseq
        %v477 = vshrl.u32 %v476, 7
        %v478 = vsub.s32 0, %v477
        %v479 = vrot.slane %v474, %v478
        %v513 = vunpack.c.l.b16 %v442
        %v514 = vunpack.c.l.b16 %v443
        %v515 = vunpack.c.l.b16 %v444
        %v516 = vunpack.c.l.b16 %v445
        %v517 = vunpack.c.l.b16 %v446
        %v518 = vunpack.c.l.b16 %v447
        %v519 = vunpack.c.l.b16 %v448
        %v520 = vunpack.c.l.b16 %v449
        %v521 = vunpack.c.l.b16 %v450
        %v522 = vunpack.c.l.b16 %v451
        %v523 = vunpack.c.l.b16 %v452
        %v524 = vunpack.c.l.b16 %v453
        %v525 = vunpack.c.l.b16 %v454
        %v526 = vunpack.c.l.b16 %v455
        %v527 = vunpack.c.l.b16 %v456
        %v528 = vunpack.c.l.b16 %v457
        %v529 = vunpack.c.l.b16 %v458
        %v530 = vunpack.c.l.b16 %v459
        %v531 = vunpack.c.l.b16 %v460
        %v532 = vunpack.c.l.b16 %v461
        %v533 = vunpack.c.l.b16 %v462
        %v534 = vunpack.c.l.b16 %v463
        %v535 = vunpack.c.l.b16 %v464
        %v536 = vunpack.c.l.b16 %v465
        %v537 = vunpack.c.l.b16 %v466
        %v538 = vunpack.c.l.b16 %v467
        %v539 = vunpack.c.l.b16 %v468
        %v540 = vunpack.c.l.b16 %v469
        %v541 = vunpack.c.l.b16 %v470
        %v542 = vunpack.c.l.b16 %v471
        %v543 = vunpack.c.l.b16 %v472
        %v544 = vunpack.c.l.b16 %v473
        %v545 = vpack.c.b16 %v514, %v513
        %v546 = vpack.c.b16 %v516, %v515
        %v547 = vpack.c.b16 %v518, %v517
        %v548 = vpack.c.b16 %v520, %v519
        %v549 = vpack.c.b16 %v522, %v521
        %v550 = vpack.c.b16 %v524, %v523
        %v551 = vpack.c.b16 %v526, %v525
        %v552 = vpack.c.b16 %v528, %v527
        %v553 = vpack.c.b16 %v530, %v529
        %v554 = vpack.c.b16 %v532, %v531
        %v555 = vpack.c.b16 %v534, %v533
        %v556 = vpack.c.b16 %v536, %v535
        %v557 = vpack.c.b16 %v538, %v537
        %v558 = vpack.c.b16 %v540, %v539
        %v559 = vpack.c.b16 %v542, %v541
        %v560 = vpack.c.b16 %v544, %v543
        %577 = vmatprep.subr.bf16.mxu0 0
        %578 = vmatpush1.bf16.msra.mxu0 %v545
        %579 = vmatprep.subr.bf16.mxu0 0
        %580 = vmatpush1.bf16.msra.mxu0 %v546
        %581 = vmatprep.subr.bf16.mxu0 0
        %582 = vmatpush1.bf16.msra.mxu0 %v547
        %583 = vmatprep.subr.bf16.mxu0 0
        %584 = vmatpush1.bf16.msra.mxu0 %v548
        %585 = vmatprep.subr.bf16.mxu0 0
        %586 = vmatpush1.bf16.msra.mxu0 %v549
        %587 = vmatprep.subr.bf16.mxu0 0
        %588 = vmatpush1.bf16.msra.mxu0 %v550
        %589 = vmatprep.subr.bf16.mxu0 0
        %590 = vmatpush1.bf16.msra.mxu0 %v551
        %591 = vmatprep.subr.bf16.mxu0 0
        %592 = vmatpush1.bf16.msra.mxu0 %v552
        %593 = vmatprep.subr.bf16.mxu0 0
        %594 = vmatpush1.bf16.msra.mxu0 %v553
        %595 = vmatprep.subr.bf16.mxu0 0
        %596 = vmatpush1.bf16.msra.mxu0 %v554
        %597 = vmatprep.subr.bf16.mxu0 0
        %598 = vmatpush1.bf16.msra.mxu0 %v555
        %599 = vmatprep.subr.bf16.mxu0 0
        %600 = vmatpush1.bf16.msra.mxu0 %v556
        %601 = vmatprep.subr.bf16.mxu0 0
        %602 = vmatpush1.bf16.msra.mxu0 %v557
        %603 = vmatprep.subr.bf16.mxu0 0
        %604 = vmatpush1.bf16.msra.mxu0 %v558
        %605 = vmatprep.subr.bf16.mxu0 0
        %606 = vmatpush1.bf16.msra.mxu0 %v559
        %607 = vmatprep.subr.bf16.mxu0 0
        %608 = vmatpush1.bf16.msra.mxu0 %v560
        %609 = vmatprep.mubr.bf16.mxu0 %v441
        %610 = vmatmul.mubr.bf16.gmra.mrb[0].mxu0 %v440
        %v611 = vpop.f32.mrb[0].mxu0
        %v612 = vadd.f32 %v479, %v611
        %v613 = vpop.f32.mrb[0].mxu0
        %v614 = vpop.f32.mrb[0].mxu0
        %v615 = vadd.f32 %v479, %v614
        %v616 = vpop.f32.mrb[0].mxu0
        %617 = vdwg.mxu0
        %v618 = vmax.f32 %v612, 0.0
        %v619 = vmax.f32 %v615, 0.0
        %v620 = vpack.c.bf16 %v619, %v618
        %v621 = vld [vmem:[#allocation7] sm:$0xf]
        %v622 = vld [vmem:[#allocation7 + $0x4] sm:$0xf]
        %v623 = vld [vmem:[#allocation7 + $0x8] sm:$0xf]
        %v624 = vld [vmem:[#allocation7 + $0xc] sm:$0xf]
        %v625 = vld [vmem:[#allocation7 + $0x10] sm:$0xf]
        %v626 = vld [vmem:[#allocation7 + $0x14] sm:$0xf]
        %v627 = vld [vmem:[#allocation7 + $0x18] sm:$0xf]
        %v628 = vld [vmem:[#allocation7 + $0x1c] sm:$0xf]
        %v629 = vld [vmem:[#allocation7 + $0x20] sm:$0xf]
        %v630 = vld [vmem:[#allocation7 + $0x24] sm:$0xf]
        %v631 = vld [vmem:[#allocation7 + $0x28] sm:$0xf]
        %v632 = vld [vmem:[#allocation7 + $0x2c] sm:$0xf]
        %v633 = vld [vmem:[#allocation7 + $0x30] sm:$0xf]
        %v634 = vld [vmem:[#allocation7 + $0x34] sm:$0xf]
        %v635 = vld [vmem:[#allocation7 + $0x38] sm:$0xf]
        %v636 = vld [vmem:[#allocation7 + $0x3c] sm:$0xf]
        %v637 = vld [vmem:[%s6] sm:$0x1]
        %v639 = vlaneseq
        %v640 = vshrl.u32 %v639, 7
        %v641 = vsub.s32 0, %v640
        %v642 = vrot.slane %v637, %v641
        %v660 = vunpack.c.l.b16 %v621
        %v661 = vunpack.c.l.b16 %v622
        %v662 = vunpack.c.l.b16 %v623
        %v663 = vunpack.c.l.b16 %v624
        %v664 = vunpack.c.l.b16 %v625
        %v665 = vunpack.c.l.b16 %v626
        %v666 = vunpack.c.l.b16 %v627
        %v667 = vunpack.c.l.b16 %v628
        %v668 = vunpack.c.l.b16 %v629
        %v669 = vunpack.c.l.b16 %v630
        %v670 = vunpack.c.l.b16 %v631
        %v671 = vunpack.c.l.b16 %v632
        %v672 = vunpack.c.l.b16 %v633
        %v673 = vunpack.c.l.b16 %v634
        %v674 = vunpack.c.l.b16 %v635
        %v675 = vunpack.c.l.b16 %v636
        %v676 = vpack.c.b16 %v661, %v660
        %v677 = vpack.c.b16 %v663, %v662
        %v678 = vpack.c.b16 %v665, %v664
        %v679 = vpack.c.b16 %v667, %v666
        %v680 = vpack.c.b16 %v669, %v668
        %v681 = vpack.c.b16 %v671, %v670
        %v682 = vpack.c.b16 %v673, %v672
        %v683 = vpack.c.b16 %v675, %v674
        %692 = vmatprep.subr.bf16.mxu0 0
        %693 = vmatpush1.bf16.msra.mxu0 %v676
        %694 = vmatprep.subr.bf16.mxu0 0
        %695 = vmatpush1.bf16.msra.mxu0 %v677
        %696 = vmatprep.subr.bf16.mxu0 0
        %697 = vmatpush1.bf16.msra.mxu0 %v678
        %698 = vmatprep.subr.bf16.mxu0 0
        %699 = vmatpush1.bf16.msra.mxu0 %v679
        %700 = vmatprep.subr.bf16.mxu0 0
        %701 = vmatpush1.bf16.msra.mxu0 %v680
        %702 = vmatprep.subr.bf16.mxu0 0
        %703 = vmatpush1.bf16.msra.mxu0 %v681
        %704 = vmatprep.subr.bf16.mxu0 0
        %705 = vmatpush1.bf16.msra.mxu0 %v682
        %706 = vmatprep.subr.bf16.mxu0 0
        %707 = vmatpush1.bf16.msra.mxu0 %v683
        %708 = vmatprep.subr.bf16.mxu0 0
        %709 = vmatpush1.bf16.msra.mxu0 0
        %710 = vmatprep.subr.bf16.mxu0 0
        %711 = vmatpush1.bf16.msra.mxu0 0
        %712 = vmatprep.subr.bf16.mxu0 0
        %713 = vmatpush1.bf16.msra.mxu0 0
        %714 = vmatprep.subr.bf16.mxu0 0
        %715 = vmatpush1.bf16.msra.mxu0 0
        %716 = vmatprep.subr.bf16.mxu0 0
        %717 = vmatpush1.bf16.msra.mxu0 0
        %718 = vmatprep.subr.bf16.mxu0 0
        %719 = vmatpush1.bf16.msra.mxu0 0
        %720 = vmatprep.subr.bf16.mxu0 0
        %721 = vmatpush1.bf16.msra.mxu0 0
        %722 = vmatprep.subr.bf16.mxu0 0
        %723 = vmatpush1.bf16.msra.mxu0 0
        %724 = vmatprep.mubr.bf16.mxu0 0
        %725 = vmatmul.mubr.bf16.gmra.mrb[0].mxu0 %v620
        %v726 = vpop.f32.mrb[0].mxu0
        %v727 = vadd.f32 %v642, %v726
        %v728 = vpop.f32.mrb[0].mxu0
        %v729 = vpop.f32.mrb[0].mxu0
        %v730 = vadd.f32 %v642, %v729
        %v731 = vpop.f32.mrb[0].mxu0
        %732 = vdwg.mxu0
        %733 = vmax.xlane.f32.xlu0 %v727
        %v734 = vpop.xlane.xlu0 %733
        %735 = vmax.xlane.f32.xlu0 %v730
        %v736 = vpop.xlane.xlu0 %735
        %v737 = vsub.f32 %v727, %v734
        %v738 = vsub.f32 %v730, %v736
        %v739 = vmul.f32 %v737, 1.442695
        %v740 = vpow.pop %v739
        %v741 = vmul.f32 %v738, 1.442695
        %v742 = vpow.pop %v741
        %743 = vadd.xlane.f32.xlu0 %v740
        %v744 = vpop.xlane.xlu0 %743
        %745 = vadd.xlane.f32.xlu0 %v742
        %v746 = vpop.xlane.xlu0 %745
        %v747 = vrcp.pop %v744
        %v748 = vrcp.pop %v746
        %v749 = vmul.f32 %v740, %v747
        %v750 = vmul.f32 %v742, %v748
        %vm751 = vcmask 64512
        %752 = vst.msk [vmem:[%s343] sm:$0xff] %vm751, %v749
        %753 = vst.msk [vmem:[%s343 + $0x8] sm:$0xff] %vm751, %v750
        %s754 = smul.u32 2, %s23
        %p755 = scmp.lt.s32.totalorder %s754, 3
        %s756 = scalar_select %p755, %s754, 3
        %s757 = smul.addr %s756, 8
        %s758 = scalar_lea.vmem %s7, %s757
        // Predicated region
        $region65: #{tpu_custom_call.1} parent=47 // pred_check
          %p759 = pneg %p193
        $region66: #{tpu_custom_call.1} parent=47 // pred_check_branch
          %761 = sbr.rel (%p759) target = $region68
        $region67: #{tpu_custom_call.1} parent=47 // pred_region
          %s762 = smul.u32 2, %s23
        $region68: #{tpu_custom_call.1} parent=47 // pred_fallthru
          _
      $region48: #{tpu_custom_call.1} parent=5 // pred_fallthru
        _
      %p763 = scmp.le.s32.totalorder 2, %s18
      // Predicated region
      $region69: #{tpu_custom_call.1} parent=5 // pred_check
        %p764 = pneg %p763
      $region70: #{tpu_custom_call.1} parent=5 // pred_check_branch
        %766 = sbr.rel (%p764) target = $region72
      $region71: #{tpu_custom_call.1} parent=5 // pred_region
        %s767 = ssub.s32 %s18, 2
        // Predicated region
        $region73: #{tpu_custom_call.1} parent=71 // pred_check
          %p768 = pneg %p199
        $region74: #{tpu_custom_call.1} parent=71 // pred_check_branch
          %770 = sbr.rel (%p768) target = $region76
        $region75: #{tpu_custom_call.1} parent=71 // pred_region
          %s771 = smul.u32 2, %s24
          %p772 = scmp.lt.s32.totalorder %s771, 3
          %s773 = scalar_select %p772, %s771, 3
          %s774 = smul.addr %s773, 8
          %s775 = scalar_lea.vmem %s7, %s774
        $region76: #{tpu_custom_call.1} parent=71 // pred_fallthru
          _
      $region72: #{tpu_custom_call.1} parent=5 // pred_fallthru
        _
    $region6: #{tpu_custom_call.1} parent=1 // loop_footer
      %s22 = sadd.s32 1, %s18
    $region7: #{tpu_custom_call.1} parent=1 // loop_footer_branch
      %17 = sbr.rel target = $region3
    $region8: #{tpu_custom_call.1} parent=1 // loop_exit
      _
    %776 = vsyncpa [#allocation3], 1
    %s777 = scalar_lea.sflag [#allocation3], 1
    %778 = vsyncpa %s777, 1
    %779 = vsyncpa [#allocation5], 1
    %780 = vsyncpa [#allocation8], 1

</llo_original>
